<compile_context>
chip_gen: v5e
topology: v5e:2x2
jax: 0.10.0
libtpu: 0.0.40
codegen_flags: <defaults>
</compile_context>

<pallas_src>
import math

import jax
import jax.numpy as jnp
from jax.experimental import pallas as pl
from jax.experimental.pallas import tpu as pltpu


def _round_up(a: int, b: int) -> int:
    return -(-a // b) * b


def _gaussian_kernel(x_ref, sel_ref, off_ref, neta_ref, o_ref):
    # x_ref:    (bm, g*D)   g original rows packed per kernel row (lane-dense-ish)
    # sel_ref:  (g*D, g*K)  0/1 selector: column group j sums input lane group j
    # off_ref:  (1, g*K)    offsets tiled g times along lanes
    # neta_ref: (1, g*K)    (-etas) tiled g times along lanes
    # o_ref:    (bm, g*K)   lane-dense output slab (g*K is a multiple of 128)
    off = off_ref[...]
    neg_eta = neta_ref[...]

    x = x_ref[...].astype(jnp.float32)
    sq = x * x

    # Segmented sum-of-squares over each row's D-lane group AND broadcast of
    # the result across that group's K output lanes, fused into a single MXU
    # matmul against a 0/1 selector (the MXU is otherwise idle here; this keeps
    # the reduction off the XLU/VPU).  HIGHEST precision keeps f32 accuracy.
    norm2 = jax.lax.dot_general(
        sq,
        sel_ref[...],
        dimension_numbers=(((1,), (0,)), ((), ())),
        precision=jax.lax.Precision.HIGHEST,
        preferred_element_type=jnp.float32,
    )                                              # (bm, g*K)

    norm = jnp.sqrt(norm2)                         # EUP
    dx = norm - off
    o_ref[...] = jnp.exp(neg_eta * dx * dx).astype(o_ref.dtype)


def gaussian(x, offsets, etas, *, max_tile_rows=2048, min_grid_steps=8,
             out_dtype=jnp.float32):
    """Gaussian smearing: exp(-etas * (||x||_2 - offsets)**2).

    x: (..., D); offsets, etas: (K,).  Returns (..., K) in `out_dtype`
    (keep float32 to match the PyTorch reference; bfloat16 halves the dominant
    HBM write traffic if the caller tolerates it).
    """
    *lead, D = x.shape
    K = int(offsets.shape[0])
    N = int(math.prod(lead)) if lead else 1
    xf = x.reshape(N, D)

    # Row-group factor so the kernel's output slab width g*K is a multiple of
    # 128 lanes (unmasked full-width stores, wide writeback DMA).
    g = 128 // math.gcd(K, 128)
    if g * K > 512:          # pathological K: fall back to the plain layout
        g = 1

    # ---- tile selection -----------------------------------------------------
    align = 8 * g                                    # sublane alignment after packing
    max_tile_rows = max(align, (max_tile_rows // align) * align)
    n_aligned = _round_up(N, align)
    # biggest tile up to max_tile_rows, but keep >= min_grid_steps steps for
    # large inputs (v7x has 2 TensorCores); floor of 256 rows amortizes the
    # ~0.35us per-grid-step overhead for small/medium N.
    target = max(align, _round_up(-(-N // min_grid_steps), align), 256)
    tile_rows = min(max_tile_rows, n_aligned, target)
    n_pad = _round_up(N, tile_rows)

    if n_pad != N:
        xf = jnp.pad(xf, ((0, n_pad - N), (0, 0)))   # padded rows are sliced off below

    # Free row-major regroup: g original rows per kernel row.
    x2 = xf.reshape(n_pad // g, g * D)

    # 0/1 selector S[a, b] = (a // D == b // K).
    sel = (jnp.arange(g * D)[:, None] // D ==
           jnp.arange(g * K)[None, :] // K).astype(jnp.float32)

    off_t = jnp.tile(offsets.astype(jnp.float32), g).reshape(1, g * K)
    neg_eta_t = jnp.tile(-etas.astype(jnp.float32), g).reshape(1, g * K)

    bm = tile_rows // g
    grid = (n_pad // tile_rows,)

    out2 = pl.pallas_call(
        _gaussian_kernel,
        out_shape=jax.ShapeDtypeStruct((n_pad // g, g * K), out_dtype),
        grid_spec=pltpu.PrefetchScalarGridSpec(
            num_scalar_prefetch=0,
            grid=grid,
            in_specs=[
                pl.BlockSpec((bm, g * D), lambda i: (i, 0)),      # x tile
                pl.BlockSpec((g * D, g * K), lambda i: (0, 0)),   # selector (resident)
                pl.BlockSpec((1, g * K), lambda i: (0, 0)),       # offsets  (resident)
                pl.BlockSpec((1, g * K), lambda i: (0, 0)),       # -etas    (resident)
            ],
            out_specs=pl.BlockSpec((bm, g * K), lambda i: (i, 0)),
        ),
        compiler_params=pltpu.CompilerParams(
            dimension_semantics=("parallel",),
        ),
    )(x2, sel, off_t, neg_eta_t)

    out = out2.reshape(n_pad, K)[:N]                 # undo packing + drop padded tail
    return out.reshape(*lead, K) if lead else out.reshape(K)


if __name__ == "__main__":
    key = jax.random.PRNGKey(0)

    # Small shapes consistent with the module: N points with D-dim vectors
    # smeared onto K gaussian basis functions.  N is deliberately NOT a
    # multiple of the tile/packing size so the padded-tail path is exercised.
    N, D, K = 200, 16, 32

    x = jax.random.normal(key, (N, D), dtype=jnp.float32)

    # Deterministic "buffer" parameters (the module receives them as tensors).
    offsets = jnp.linspace(0.0, 4.0, K, dtype=jnp.float32)
    etas = jnp.full((K,), 0.5, dtype=jnp.float32)

    out = jax.block_until_ready(gaussian(x, offsets, etas))

    # Pure-JAX reference for the PyTorch forward pass.
    norm = jnp.linalg.norm(x, axis=-1, keepdims=True)
    ref = jnp.exp(-etas[None, :] * (norm - offsets[None, :]) ** 2)

    assert out.shape == (N, K)
    assert jnp.allclose(out, ref, atol=1e-5, rtol=1e-5), float(
        jnp.max(jnp.abs(out - ref)))

    print("KERNEL_OK")
</pallas_src>

<mosaic_0001>
module attributes {stable_mosaic.version = 11 : i64} {
  func.func @_gaussian_kernel(%arg0: i32, %arg1: memref<56x64xf32, #tpu.memory_space<vmem>>, %arg2: memref<64x128xf32, #tpu.memory_space<vmem>>, %arg3: memref<1x128xf32, #tpu.memory_space<vmem>>, %arg4: memref<1x128xf32, #tpu.memory_space<vmem>>, %arg5: memref<56x128xf32, #tpu.memory_space<vmem>>) attributes {dimension_semantics = [#tpu.dimension_semantics<parallel>], iteration_bounds = array<i64: 1>, scalar_prefetch = 0 : i64, scratch_operands = 0 : i64, tpu.core_type = #tpu.core_type<tc>, window_params = [{transform_indices = @transform_0, window_bounds = array<i64: 56, 64>}, {pipeline_mode = #tpu.pipeline_mode<synchronous>, transform_indices = @transform_1, window_bounds = array<i64: 64, 128>}, {pipeline_mode = #tpu.pipeline_mode<synchronous>, transform_indices = @transform_2, window_bounds = array<i64: 1, 128>}, {pipeline_mode = #tpu.pipeline_mode<synchronous>, transform_indices = @transform_3, window_bounds = array<i64: 1, 128>}, {transform_indices = @transform_4, window_bounds = array<i64: 56, 128>}]} {
    %c0 = arith.constant 0 : index
    %c0_0 = arith.constant 0 : index
    %0 = vector.load %arg3[%c0, %c0_0] : memref<1x128xf32, #tpu.memory_space<vmem>>, vector<1x128xf32>
    %c0_1 = arith.constant 0 : index
    %c0_2 = arith.constant 0 : index
    %1 = vector.load %arg4[%c0_1, %c0_2] : memref<1x128xf32, #tpu.memory_space<vmem>>, vector<1x128xf32>
    %c0_3 = arith.constant 0 : index
    %c0_4 = arith.constant 0 : index
    %2 = vector.load %arg1[%c0_3, %c0_4] : memref<56x64xf32, #tpu.memory_space<vmem>>, vector<56x64xf32>
    %3 = arith.mulf %2, %2 : vector<56x64xf32>
    %c0_5 = arith.constant 0 : index
    %c0_6 = arith.constant 0 : index
    %4 = vector.load %arg2[%c0_5, %c0_6] : memref<64x128xf32, #tpu.memory_space<vmem>>, vector<64x128xf32>
    %cst = arith.constant dense<0.000000e+00> : vector<56x128xf32>
    %5 = tpu.matmul %3, %4, %cst {dimension_numbers = #tpu.dot_dimension_numbers<[1], [0], [0], [1], [0, 0, 1, 1], [], []>, precision = #tpu.contract_precision<fp32>} : vector<56x64xf32>, vector<64x128xf32>, vector<56x128xf32> -> vector<56x128xf32>
    %6 = math.sqrt %5 : vector<56x128xf32>
    %7 = vector.broadcast %0 : vector<1x128xf32> to vector<56x128xf32>
    %8 = arith.subf %6, %7 : vector<56x128xf32>
    %9 = vector.broadcast %1 : vector<1x128xf32> to vector<56x128xf32>
    %10 = arith.mulf %9, %8 : vector<56x128xf32>
    %11 = arith.mulf %10, %8 : vector<56x128xf32>
    %12 = math.exp %11 : vector<56x128xf32>
    %c0_7 = arith.constant 0 : index
    %c0_8 = arith.constant 0 : index
    %13 = vector.load %arg5[%c0_7, %c0_8] : memref<56x128xf32, #tpu.memory_space<vmem>>, vector<56x128xf32>
    tpu.vector_store %arg5[%c0_7, %c0_8], %12 {strides = array<i32>} : memref<56x128xf32, #tpu.memory_space<vmem>>, vector<56x128xf32>,
    return
  }
  func.func @transform_0(%arg0: i32) -> (i32, i32) {
    %c0_i32 = arith.constant 0 : i32
    %c0_i32_0 = arith.constant 0 : i32
    return %arg0, %c0_i32 : i32, i32
  }
  func.func @transform_1(%arg0: i32) -> (i32, i32) {
    %c0_i32 = arith.constant 0 : i32
    %c0_i32_0 = arith.constant 0 : i32
    %c0_i32_1 = arith.constant 0 : i32
    return %c0_i32, %c0_i32_0 : i32, i32
  }
  func.func @transform_2(%arg0: i32) -> (i32, i32) {
    %c0_i32 = arith.constant 0 : i32
    %c0_i32_0 = arith.constant 0 : i32
    %c0_i32_1 = arith.constant 0 : i32
    return %c0_i32, %c0_i32_0 : i32, i32
  }
  func.func @transform_3(%arg0: i32) -> (i32, i32) {
    %c0_i32 = arith.constant 0 : i32
    %c0_i32_0 = arith.constant 0 : i32
    %c0_i32_1 = arith.constant 0 : i32
    return %c0_i32, %c0_i32_0 : i32, i32
  }
  func.func @transform_4(%arg0: i32) -> (i32, i32) {
    %c0_i32 = arith.constant 0 : i32
    %c0_i32_0 = arith.constant 0 : i32
    return %arg0, %c0_i32 : i32, i32
  }
}

</mosaic_0001>

<llo_original>
// kernel: tpu_custom_call.1
$region0: #{tpu_custom_call.1}
  #allocation0 [shape = 'u32[]', space=smem, size = 0x4, offset = 0x4, fixed_abs, tag = 'smem constant byte address 0x4 - core index']
  #allocation1 [shape = 'u32[72,128]{1,0:T(1,128)}', space=vmem, size = 0x9000, scoped, tag = 'internal scratch']
  %s0 = inlined_call_operand.hbm [shape: f32[56,64], index: 0, kind: input, shape index: {}]
  %s1 = inlined_call_operand.hbm [shape: f32[64,128], index: 1, kind: input, shape index: {}]
  %s2 = inlined_call_operand.vmem [shape: f32[1,128], index: 2, kind: input, shape index: {}]
  %s3 = inlined_call_operand.vmem [shape: f32[1,128], index: 3, kind: input, shape index: {}]
  %s4 = inlined_call_operand.hbm [shape: f32[56,128], index: 4, kind: output, shape index: {}]
  %s5 = sld [smem:[#allocation0]]
  $region34: #{tpu_custom_call.1} parent=0
    _
  %s7 = ssub.s32 1, %s5
  %s8 = scalar_select 0, %s7, %s5
  $region1: #{tpu_custom_call.1} parent=0
    #allocation2 [shape = 'u8[28672]{0}', space=vmem, size = 0x7000, scoped, tag = 'input window, operand 0, single buffered']
    #allocation3 [shape = 's32[1]{0}', space=sflag, size = 0x4, scoped, tag = 'scoped memory for tpu_custom_call.1']
    #allocation4 [shape = 's32[1]{0}', space=sflag, size = 0x4, scoped, tag = 'scoped memory for tpu_custom_call.1']
    #allocation5 [shape = 'u8[32768]{0}', space=vmem, size = 0x8000, scoped, tag = 'input window, operand 1, single buffered']
    #allocation6 [shape = 's32[1]{0}', space=sflag, size = 0x4, scoped, tag = 'scoped memory for tpu_custom_call.1']
    #allocation7 [shape = 'u8[28672]{0}', space=vmem, size = 0x7000, scoped, tag = 'output window, operand 0, single buffered']
    %9 = vsyncpa [#allocation3], 0
    %10 = vsyncpa [#allocation6], 0
    %11 = vsyncpa [#allocation4], 0
    // Predicated region
    $region2: #{tpu_custom_call.1} parent=1 // pred_check
      _
    $region3: #{tpu_custom_call.1} parent=1 // pred_check_branch
      %13 = sbr.rel (0) target = $region5
    $region4: #{tpu_custom_call.1} parent=1 // pred_region
      %15 = vsyncadd [#allocation3], 0
      %s16 = sshll.u32 %s0, 4
      %s17 = int_to_ptr.hbm [resolvable:$true] %s16
      %s18 = sshll.u32 [#allocation2], 4
      %s19 = int_to_ptr.vmem [resolvable:$true] %s18
      %24 = dma.hbm_to_vmem [thread:$0]  %s17, 896, %s19, [#allocation3], 128, 128, 8
    $region5: #{tpu_custom_call.1} parent=1 // pred_fallthru
      _
    // Predicated region
    $region6: #{tpu_custom_call.1} parent=1 // pred_check
      _
    $region7: #{tpu_custom_call.1} parent=1 // pred_check_branch
      %26 = sbr.rel (0) target = $region9
    $region8: #{tpu_custom_call.1} parent=1 // pred_region
      %28 = vsyncadd [#allocation6], 0
      %s29 = sshll.u32 %s1, 4
      %s30 = int_to_ptr.hbm [resolvable:$true] %s29
      %s31 = sshll.u32 [#allocation5], 4
      %s32 = int_to_ptr.vmem [resolvable:$true] %s31
      %37 = dma.hbm_to_vmem [thread:$0]  %s30, 1024, %s32, [#allocation6], 128, 128, 8
    $region9: #{tpu_custom_call.1} parent=1 // pred_fallthru
      _
    // Predicated region
    $region10: #{tpu_custom_call.1} parent=1 // pred_check
      _
    $region11: #{tpu_custom_call.1} parent=1 // pred_check_branch
      %39 = sbr.rel (0) target = $region13
    $region12: #{tpu_custom_call.1} parent=1 // pred_region
      _
    $region13: #{tpu_custom_call.1} parent=1 // pred_fallthru
      _
    // Predicated region
    $region14: #{tpu_custom_call.1} parent=1 // pred_check
      _
    $region15: #{tpu_custom_call.1} parent=1 // pred_check_branch
      %41 = sbr.rel (0) target = $region17
    $region16: #{tpu_custom_call.1} parent=1 // pred_region
      _
    $region17: #{tpu_custom_call.1} parent=1 // pred_fallthru
      _
    // Predicated region
    $region18: #{tpu_custom_call.1} parent=1 // pred_check
      _
    $region19: #{tpu_custom_call.1} parent=1 // pred_check_branch
      %43 = sbr.rel (0) target = $region21
    $region20: #{tpu_custom_call.1} parent=1 // pred_region
      %45 = dma.done [#allocation3], 896
    $region21: #{tpu_custom_call.1} parent=1 // pred_fallthru
      _
    // Predicated region
    $region22: #{tpu_custom_call.1} parent=1 // pred_check
      _
    $region23: #{tpu_custom_call.1} parent=1 // pred_check_branch
      %47 = sbr.rel (0) target = $region25
    $region24: #{tpu_custom_call.1} parent=1 // pred_region
      %49 = dma.done [#allocation6], 1024
    $region25: #{tpu_custom_call.1} parent=1 // pred_fallthru
      _
    %v50 = vld [vmem:[%s2] sm:$0x1]
    %v51 = vld [vmem:[%s3] sm:$0x1]
    %v52 = vld [vmem:[#allocation2] sm:$0xff]
    %v53 = vld [vmem:[#allocation2 + $0x8] sm:$0xff]
    %v54 = vld [vmem:[#allocation2 + $0x10] sm:$0xff]
    %v55 = vld [vmem:[#allocation2 + $0x18] sm:$0xff]
    %v56 = vld [vmem:[#allocation2 + $0x20] sm:$0xff]
    %v57 = vld [vmem:[#allocation2 + $0x28] sm:$0xff]
    %v58 = vld [vmem:[#allocation2 + $0x30] sm:$0xff]
    %v59 = vmul.f32 %v52, %v52
    %v60 = vmul.f32 %v53, %v53
    %v61 = vmul.f32 %v54, %v54
    %v62 = vmul.f32 %v55, %v55
    %v63 = vmul.f32 %v56, %v56
    %v64 = vmul.f32 %v57, %v57
    %v65 = vmul.f32 %v58, %v58
    %v66 = vld [vmem:[#allocation5] sm:$0xff]
    %v67 = vld [vmem:[#allocation5 + $0x8] sm:$0xff]
    %v68 = vld [vmem:[#allocation5 + $0x10] sm:$0xff]
    %v69 = vld [vmem:[#allocation5 + $0x18] sm:$0xff]
    %v70 = vld [vmem:[#allocation5 + $0x20] sm:$0xff]
    %v71 = vld [vmem:[#allocation5 + $0x28] sm:$0xff]
    %v72 = vld [vmem:[#allocation5 + $0x30] sm:$0xff]
    %v73 = vld [vmem:[#allocation5 + $0x38] sm:$0xff]
    %vm74 = vcmask 523264
    %v76 = vsel %vm74, %v59, 0
    %v79 = vsel %vm74, %v60, 0
    %v82 = vsel %vm74, %v61, 0
    %v85 = vsel %vm74, %v62, 0
    %v88 = vsel %vm74, %v63, 0
    %v91 = vsel %vm74, %v64, 0
    %v94 = vsel %vm74, %v65, 0
    %96 = vmatpush.msra.mxu0 0.0
    %97 = vmatpush.msra.mxu0 0.0
    %98 = vmatpush.msra.mxu0 0.0
    %99 = vmatpush.msra.mxu0 0.0
    %100 = vmatpush.msra.mxu0 0.0
    %101 = vmatpush.msra.mxu0 0.0
    %102 = vmatpush.msra.mxu0 0.0
    %103 = vmatpush.msra.mxu0 0.0
    %v104 = vand.u32 %v73, 4294901760
    %105 = vmatpush.msra.mxu0 %v104
    %v106 = vand.u32 %v72, 4294901760
    %107 = vmatpush.msra.mxu0 %v106
    %v108 = vand.u32 %v71, 4294901760
    %109 = vmatpush.msra.mxu0 %v108
    %v110 = vand.u32 %v70, 4294901760
    %111 = vmatpush.msra.mxu0 %v110
    %v112 = vand.u32 %v69, 4294901760
    %113 = vmatpush.msra.mxu0 %v112
    %v114 = vand.u32 %v68, 4294901760
    %115 = vmatpush.msra.mxu0 %v114
    %v116 = vand.u32 %v67, 4294901760
    %117 = vmatpush.msra.mxu0 %v116
    %v118 = vand.u32 %v66, 4294901760
    %119 = vmatpush.msra.mxu0 %v118
    %v120 = vand.u32 %v76, 4294901760
    %v121 = vsub.f32 %v76, %v120
    %v122 = vand.u32 %v121, 4294901760
    %v123 = vsub.f32 %v121, %v122
    %v124 = vand.u32 %v123, 4294901760
    %125 = vmatmul.f32.gmra.mxu0 %v124
    %v126 = vpop.f32.mrf.mxu0
    %v127 = vadd.f32 0.0, %v126
    %v128 = vand.u32 %v79, 4294901760
    %v129 = vsub.f32 %v79, %v128
    %v130 = vand.u32 %v129, 4294901760
    %v131 = vsub.f32 %v129, %v130
    %v132 = vand.u32 %v131, 4294901760
    %133 = vmatmul.f32.gmra.mxu0 %v132
    %v134 = vpop.f32.mrf.mxu0
    %v135 = vadd.f32 0.0, %v134
    %v136 = vand.u32 %v82, 4294901760
    %v137 = vsub.f32 %v82, %v136
    %v138 = vand.u32 %v137, 4294901760
    %v139 = vsub.f32 %v137, %v138
    %v140 = vand.u32 %v139, 4294901760
    %141 = vmatmul.f32.gmra.mxu0 %v140
    %v142 = vpop.f32.mrf.mxu0
    %v143 = vadd.f32 0.0, %v142
    %v144 = vand.u32 %v85, 4294901760
    %v145 = vsub.f32 %v85, %v144
    %v146 = vand.u32 %v145, 4294901760
    %v147 = vsub.f32 %v145, %v146
    %v148 = vand.u32 %v147, 4294901760
    %149 = vmatmul.f32.gmra.mxu0 %v148
    %v150 = vpop.f32.mrf.mxu0
    %v151 = vadd.f32 0.0, %v150
    %v152 = vand.u32 %v88, 4294901760
    %v153 = vsub.f32 %v88, %v152
    %v154 = vand.u32 %v153, 4294901760
    %v155 = vsub.f32 %v153, %v154
    %v156 = vand.u32 %v155, 4294901760
    %157 = vmatmul.f32.gmra.mxu0 %v156
    %v158 = vpop.f32.mrf.mxu0
    %v159 = vadd.f32 0.0, %v158
    %v160 = vand.u32 %v91, 4294901760
    %v161 = vsub.f32 %v91, %v160
    %v162 = vand.u32 %v161, 4294901760
    %v163 = vsub.f32 %v161, %v162
    %v164 = vand.u32 %v163, 4294901760
    %165 = vmatmul.f32.gmra.mxu0 %v164
    %v166 = vpop.f32.mrf.mxu0
    %v167 = vadd.f32 0.0, %v166
    %v168 = vand.u32 %v94, 4294901760
    %v169 = vsub.f32 %v94, %v168
    %v170 = vand.u32 %v169, 4294901760
    %v171 = vsub.f32 %v169, %v170
    %v172 = vand.u32 %v171, 4294901760
    %173 = vmatmul.f32.gmra.mxu0 %v172
    %v174 = vpop.f32.mrf.mxu0
    %v175 = vadd.f32 0.0, %v174
    %176 = vdwg.mxu0
    %177 = vmatpush.msra.mxu0 0.0
    %178 = vmatpush.msra.mxu0 0.0
    %179 = vmatpush.msra.mxu0 0.0
    %180 = vmatpush.msra.mxu0 0.0
    %181 = vmatpush.msra.mxu0 0.0
    %182 = vmatpush.msra.mxu0 0.0
    %183 = vmatpush.msra.mxu0 0.0
    %184 = vmatpush.msra.mxu0 0.0
    %v185 = vand.u32 %v73, 4294901760
    %v186 = vsub.f32 %v73, %v185
    %v187 = vand.u32 %v186, 4294901760
    %v188 = vsub.f32 %v186, %v187
    %v189 = vand.u32 %v188, 4294901760
    %190 = vmatpush.msra.mxu0 %v189
    %v191 = vand.u32 %v72, 4294901760
    %v192 = vsub.f32 %v72, %v191
    %v193 = vand.u32 %v192, 4294901760
    %v194 = vsub.f32 %v192, %v193
    %v195 = vand.u32 %v194, 4294901760
    %196 = vmatpush.msra.mxu0 %v195
    %v197 = vand.u32 %v71, 4294901760
    %v198 = vsub.f32 %v71, %v197
    %v199 = vand.u32 %v198, 4294901760
    %v200 = vsub.f32 %v198, %v199
    %v201 = vand.u32 %v200, 4294901760
    %202 = vmatpush.msra.mxu0 %v201
    %v203 = vand.u32 %v70, 4294901760
    %v204 = vsub.f32 %v70, %v203
    %v205 = vand.u32 %v204, 4294901760
    %v206 = vsub.f32 %v204, %v205
    %v207 = vand.u32 %v206, 4294901760
    %208 = vmatpush.msra.mxu0 %v207
    %v209 = vand.u32 %v69, 4294901760
    %v210 = vsub.f32 %v69, %v209
    %v211 = vand.u32 %v210, 4294901760
    %v212 = vsub.f32 %v210, %v211
    %v213 = vand.u32 %v212, 4294901760
    %214 = vmatpush.msra.mxu0 %v213
    %v215 = vand.u32 %v68, 4294901760
    %v216 = vsub.f32 %v68, %v215
    %v217 = vand.u32 %v216, 4294901760
    %v218 = vsub.f32 %v216, %v217
    %v219 = vand.u32 %v218, 4294901760
    %220 = vmatpush.msra.mxu0 %v219
    %v221 = vand.u32 %v67, 4294901760
    %v222 = vsub.f32 %v67, %v221
    %v223 = vand.u32 %v222, 4294901760
    %v224 = vsub.f32 %v222, %v223
    %v225 = vand.u32 %v224, 4294901760
    %226 = vmatpush.msra.mxu0 %v225
    %v227 = vand.u32 %v66, 4294901760
    %v228 = vsub.f32 %v66, %v227
    %v229 = vand.u32 %v228, 4294901760
    %v230 = vsub.f32 %v228, %v229
    %v231 = vand.u32 %v230, 4294901760
    %232 = vmatpush.msra.mxu0 %v231
    %v233 = vand.u32 %v76, 4294901760
    %234 = vmatmul.f32.gmra.mxu0 %v233
    %v235 = vpop.f32.mrf.mxu0
    %v236 = vadd.f32 %v127, %v235
    %v237 = vand.u32 %v79, 4294901760
    %238 = vmatmul.f32.gmra.mxu0 %v237
    %v239 = vpop.f32.mrf.mxu0
    %v240 = vadd.f32 %v135, %v239
    %v241 = vand.u32 %v82, 4294901760
    %242 = vmatmul.f32.gmra.mxu0 %v241
    %v243 = vpop.f32.mrf.mxu0
    %v244 = vadd.f32 %v143, %v243
    %v245 = vand.u32 %v85, 4294901760
    %246 = vmatmul.f32.gmra.mxu0 %v245
    %v247 = vpop.f32.mrf.mxu0
    %v248 = vadd.f32 %v151, %v247
    %v249 = vand.u32 %v88, 4294901760
    %250 = vmatmul.f32.gmra.mxu0 %v249
    %v251 = vpop.f32.mrf.mxu0
    %v252 = vadd.f32 %v159, %v251
    %v253 = vand.u32 %v91, 4294901760
    %254 = vmatmul.f32.gmra.mxu0 %v253
    %v255 = vpop.f32.mrf.mxu0
    %v256 = vadd.f32 %v167, %v255
    %v257 = vand.u32 %v94, 4294901760
    %258 = vmatmul.f32.gmra.mxu0 %v257
    %v259 = vpop.f32.mrf.mxu0
    %v260 = vadd.f32 %v175, %v259
    %261 = vdwg.mxu0
    %262 = vmatpush.msra.mxu0 0.0
    %263 = vmatpush.msra.mxu0 0.0
    %264 = vmatpush.msra.mxu0 0.0
    %265 = vmatpush.msra.mxu0 0.0
    %266 = vmatpush.msra.mxu0 0.0
    %267 = vmatpush.msra.mxu0 0.0
    %268 = vmatpush.msra.mxu0 0.0
    %269 = vmatpush.msra.mxu0 0.0
    %v270 = vand.u32 %v73, 4294901760
    %v271 = vsub.f32 %v73, %v270
    %272 = vmatpush.msra.mxu0 %v271
    %v273 = vand.u32 %v72, 4294901760
    %v274 = vsub.f32 %v72, %v273
    %275 = vmatpush.msra.mxu0 %v274
    %v276 = vand.u32 %v71, 4294901760
    %v277 = vsub.f32 %v71, %v276
    %278 = vmatpush.msra.mxu0 %v277
    %v279 = vand.u32 %v70, 4294901760
    %v280 = vsub.f32 %v70, %v279
    %281 = vmatpush.msra.mxu0 %v280
    %v282 = vand.u32 %v69, 4294901760
    %v283 = vsub.f32 %v69, %v282
    %284 = vmatpush.msra.mxu0 %v283
    %v285 = vand.u32 %v68, 4294901760
    %v286 = vsub.f32 %v68, %v285
    %287 = vmatpush.msra.mxu0 %v286
    %v288 = vand.u32 %v67, 4294901760
    %v289 = vsub.f32 %v67, %v288
    %290 = vmatpush.msra.mxu0 %v289
    %v291 = vand.u32 %v66, 4294901760
    %v292 = vsub.f32 %v66, %v291
    %293 = vmatpush.msra.mxu0 %v292
    %v294 = vand.u32 %v76, 4294901760
    %v295 = vsub.f32 %v76, %v294
    %296 = vmatmul.f32.gmra.mxu0 %v295
    %v297 = vpop.f32.mrf.mxu0
    %v298 = vadd.f32 %v236, %v297
    %v299 = vand.u32 %v79, 4294901760
    %v300 = vsub.f32 %v79, %v299
    %301 = vmatmul.f32.gmra.mxu0 %v300
    %v302 = vpop.f32.mrf.mxu0
    %v303 = vadd.f32 %v240, %v302
    %v304 = vand.u32 %v82, 4294901760
    %v305 = vsub.f32 %v82, %v304
    %306 = vmatmul.f32.gmra.mxu0 %v305
    %v307 = vpop.f32.mrf.mxu0
    %v308 = vadd.f32 %v244, %v307
    %v309 = vand.u32 %v85, 4294901760
    %v310 = vsub.f32 %v85, %v309
    %311 = vmatmul.f32.gmra.mxu0 %v310
    %v312 = vpop.f32.mrf.mxu0
    %v313 = vadd.f32 %v248, %v312
    %v314 = vand.u32 %v88, 4294901760
    %v315 = vsub.f32 %v88, %v314
    %316 = vmatmul.f32.gmra.mxu0 %v315
    %v317 = vpop.f32.mrf.mxu0
    %v318 = vadd.f32 %v252, %v317
    %v319 = vand.u32 %v91, 4294901760
    %v320 = vsub.f32 %v91, %v319
    %321 = vmatmul.f32.gmra.mxu0 %v320
    %v322 = vpop.f32.mrf.mxu0
    %v323 = vadd.f32 %v256, %v322
    %v324 = vand.u32 %v94, 4294901760
    %v325 = vsub.f32 %v94, %v324
    %326 = vmatmul.f32.gmra.mxu0 %v325
    %v327 = vpop.f32.mrf.mxu0
    %v328 = vadd.f32 %v260, %v327
    %329 = vdwg.mxu0
    %330 = vmatpush.msra.mxu0 0.0
    %331 = vmatpush.msra.mxu0 0.0
    %332 = vmatpush.msra.mxu0 0.0
    %333 = vmatpush.msra.mxu0 0.0
    %334 = vmatpush.msra.mxu0 0.0
    %335 = vmatpush.msra.mxu0 0.0
    %336 = vmatpush.msra.mxu0 0.0
    %337 = vmatpush.msra.mxu0 0.0
    %v338 = vand.u32 %v73, 4294901760
    %339 = vmatpush.msra.mxu0 %v338
    %v340 = vand.u32 %v72, 4294901760
    %341 = vmatpush.msra.mxu0 %v340
    %v342 = vand.u32 %v71, 4294901760
    %343 = vmatpush.msra.mxu0 %v342
    %v344 = vand.u32 %v70, 4294901760
    %345 = vmatpush.msra.mxu0 %v344
    %v346 = vand.u32 %v69, 4294901760
    %347 = vmatpush.msra.mxu0 %v346
    %v348 = vand.u32 %v68, 4294901760
    %349 = vmatpush.msra.mxu0 %v348
    %v350 = vand.u32 %v67, 4294901760
    %351 = vmatpush.msra.mxu0 %v350
    %v352 = vand.u32 %v66, 4294901760
    %353 = vmatpush.msra.mxu0 %v352
    %v354 = vand.u32 %v76, 4294901760
    %v355 = vsub.f32 %v76, %v354
    %v356 = vand.u32 %v355, 4294901760
    %357 = vmatmul.f32.gmra.mxu0 %v356
    %v358 = vpop.f32.mrf.mxu0
    %v359 = vadd.f32 %v298, %v358
    %v360 = vand.u32 %v79, 4294901760
    %v361 = vsub.f32 %v79, %v360
    %v362 = vand.u32 %v361, 4294901760
    %363 = vmatmul.f32.gmra.mxu0 %v362
    %v364 = vpop.f32.mrf.mxu0
    %v365 = vadd.f32 %v303, %v364
    %v366 = vand.u32 %v82, 4294901760
    %v367 = vsub.f32 %v82, %v366
    %v368 = vand.u32 %v367, 4294901760
    %369 = vmatmul.f32.gmra.mxu0 %v368
    %v370 = vpop.f32.mrf.mxu0
    %v371 = vadd.f32 %v308, %v370
    %v372 = vand.u32 %v85, 4294901760
    %v373 = vsub.f32 %v85, %v372
    %v374 = vand.u32 %v373, 4294901760
    %375 = vmatmul.f32.gmra.mxu0 %v374
    %v376 = vpop.f32.mrf.mxu0
    %v377 = vadd.f32 %v313, %v376
    %v378 = vand.u32 %v88, 4294901760
    %v379 = vsub.f32 %v88, %v378
    %v380 = vand.u32 %v379, 4294901760
    %381 = vmatmul.f32.gmra.mxu0 %v380
    %v382 = vpop.f32.mrf.mxu0
    %v383 = vadd.f32 %v318, %v382
    %v384 = vand.u32 %v91, 4294901760
    %v385 = vsub.f32 %v91, %v384
    %v386 = vand.u32 %v385, 4294901760
    %387 = vmatmul.f32.gmra.mxu0 %v386
    %v388 = vpop.f32.mrf.mxu0
    %v389 = vadd.f32 %v323, %v388
    %v390 = vand.u32 %v94, 4294901760
    %v391 = vsub.f32 %v94, %v390
    %v392 = vand.u32 %v391, 4294901760
    %393 = vmatmul.f32.gmra.mxu0 %v392
    %v394 = vpop.f32.mrf.mxu0
    %v395 = vadd.f32 %v328, %v394
    %396 = vdwg.mxu0
    %397 = vmatpush.msra.mxu0 0.0
    %398 = vmatpush.msra.mxu0 0.0
    %399 = vmatpush.msra.mxu0 0.0
    %400 = vmatpush.msra.mxu0 0.0
    %401 = vmatpush.msra.mxu0 0.0
    %402 = vmatpush.msra.mxu0 0.0
    %403 = vmatpush.msra.mxu0 0.0
    %404 = vmatpush.msra.mxu0 0.0
    %v405 = vand.u32 %v73, 4294901760
    %v406 = vsub.f32 %v73, %v405
    %v407 = vand.u32 %v406, 4294901760
    %408 = vmatpush.msra.mxu0 %v407
    %v409 = vand.u32 %v72, 4294901760
    %v410 = vsub.f32 %v72, %v409
    %v411 = vand.u32 %v410, 4294901760
    %412 = vmatpush.msra.mxu0 %v411
    %v413 = vand.u32 %v71, 4294901760
    %v414 = vsub.f32 %v71, %v413
    %v415 = vand.u32 %v414, 4294901760
    %416 = vmatpush.msra.mxu0 %v415
    %v417 = vand.u32 %v70, 4294901760
    %v418 = vsub.f32 %v70, %v417
    %v419 = vand.u32 %v418, 4294901760
    %420 = vmatpush.msra.mxu0 %v419
    %v421 = vand.u32 %v69, 4294901760
    %v422 = vsub.f32 %v69, %v421
    %v423 = vand.u32 %v422, 4294901760
    %424 = vmatpush.msra.mxu0 %v423
    %v425 = vand.u32 %v68, 4294901760
    %v426 = vsub.f32 %v68, %v425
    %v427 = vand.u32 %v426, 4294901760
    %428 = vmatpush.msra.mxu0 %v427
    %v429 = vand.u32 %v67, 4294901760
    %v430 = vsub.f32 %v67, %v429
    %v431 = vand.u32 %v430, 4294901760
    %432 = vmatpush.msra.mxu0 %v431
    %v433 = vand.u32 %v66, 4294901760
    %v434 = vsub.f32 %v66, %v433
    %v435 = vand.u32 %v434, 4294901760
    %436 = vmatpush.msra.mxu0 %v435
    %v437 = vand.u32 %v76, 4294901760
    %438 = vmatmul.f32.gmra.mxu0 %v437
    %v439 = vpop.f32.mrf.mxu0
    %v440 = vadd.f32 %v359, %v439
    %v441 = vand.u32 %v79, 4294901760
    %442 = vmatmul.f32.gmra.mxu0 %v441
    %v443 = vpop.f32.mrf.mxu0
    %v444 = vadd.f32 %v365, %v443
    %v445 = vand.u32 %v82, 4294901760
    %446 = vmatmul.f32.gmra.mxu0 %v445
    %v447 = vpop.f32.mrf.mxu0
    %v448 = vadd.f32 %v371, %v447
    %v449 = vand.u32 %v85, 4294901760
    %450 = vmatmul.f32.gmra.mxu0 %v449
    %v451 = vpop.f32.mrf.mxu0
    %v452 = vadd.f32 %v377, %v451
    %v453 = vand.u32 %v88, 4294901760
    %454 = vmatmul.f32.gmra.mxu0 %v453
    %v455 = vpop.f32.mrf.mxu0
    %v456 = vadd.f32 %v383, %v455
    %v457 = vand.u32 %v91, 4294901760
    %458 = vmatmul.f32.gmra.mxu0 %v457
    %v459 = vpop.f32.mrf.mxu0
    %v460 = vadd.f32 %v389, %v459
    %v461 = vand.u32 %v94, 4294901760
    %462 = vmatmul.f32.gmra.mxu0 %v461
    %v463 = vpop.f32.mrf.mxu0
    %v464 = vadd.f32 %v395, %v463
    %465 = vdwg.mxu0
    %466 = vmatpush.msra.mxu0 0.0
    %467 = vmatpush.msra.mxu0 0.0
    %468 = vmatpush.msra.mxu0 0.0
    %469 = vmatpush.msra.mxu0 0.0
    %470 = vmatpush.msra.mxu0 0.0
    %471 = vmatpush.msra.mxu0 0.0
    %472 = vmatpush.msra.mxu0 0.0
    %473 = vmatpush.msra.mxu0 0.0
    %v474 = vand.u32 %v73, 4294901760
    %475 = vmatpush.msra.mxu0 %v474
    %v476 = vand.u32 %v72, 4294901760
    %477 = vmatpush.msra.mxu0 %v476
    %v478 = vand.u32 %v71, 4294901760
    %479 = vmatpush.msra.mxu0 %v478
    %v480 = vand.u32 %v70, 4294901760
    %481 = vmatpush.msra.mxu0 %v480
    %v482 = vand.u32 %v69, 4294901760
    %483 = vmatpush.msra.mxu0 %v482
    %v484 = vand.u32 %v68, 4294901760
    %485 = vmatpush.msra.mxu0 %v484
    %v486 = vand.u32 %v67, 4294901760
    %487 = vmatpush.msra.mxu0 %v486
    %v488 = vand.u32 %v66, 4294901760
    %489 = vmatpush.msra.mxu0 %v488
    %v490 = vand.u32 %v76, 4294901760
    %491 = vmatmul.f32.gmra.mxu0 %v490
    %v492 = vpop.f32.mrf.mxu0
    %v493 = vadd.f32 %v440, %v492
    %v494 = vand.u32 %v79, 4294901760
    %495 = vmatmul.f32.gmra.mxu0 %v494
    %v496 = vpop.f32.mrf.mxu0
    %v497 = vadd.f32 %v444, %v496
    %v498 = vand.u32 %v82, 4294901760
    %499 = vmatmul.f32.gmra.mxu0 %v498
    %v500 = vpop.f32.mrf.mxu0
    %v501 = vadd.f32 %v448, %v500
    %v502 = vand.u32 %v85, 4294901760
    %503 = vmatmul.f32.gmra.mxu0 %v502
    %v504 = vpop.f32.mrf.mxu0
    %v505 = vadd.f32 %v452, %v504
    %v506 = vand.u32 %v88, 4294901760
    %507 = vmatmul.f32.gmra.mxu0 %v506
    %v508 = vpop.f32.mrf.mxu0
    %v509 = vadd.f32 %v456, %v508
    %v510 = vand.u32 %v91, 4294901760
    %511 = vmatmul.f32.gmra.mxu0 %v510
    %v512 = vpop.f32.mrf.mxu0
    %v513 = vadd.f32 %v460, %v512
    %v514 = vand.u32 %v94, 4294901760
    %515 = vmatmul.f32.gmra.mxu0 %v514
    %v516 = vpop.f32.mrf.mxu0
    %v517 = vadd.f32 %v464, %v516
    %518 = vdwg.mxu0
    %v519 = vrsqrt.pop %v493
    %v520 = vmul.f32 %v519, %v493
    %v521 = vmul.f32 %v520, %v519
    %v522 = vmul.f32 0.5, %v521
    %v523 = vsub.f32 1.5, %v522
    %v524 = vmul.f32 %v519, %v523
    %v525 = vmul.f32 %v493, %v524
    %vm526 = vcmp.eq.f32.partialorder %v493, inf
    %v527 = vsel %vm526, %v493, %v525
    %vm528 = vcmp.eq.f32.partialorder %v493, 0.0
    %v529 = vand.u32 %v493, 2147483648
    %v530 = vsel %vm528, %v529, %v527
    %v531 = vrsqrt.pop %v497
    %v532 = vmul.f32 %v531, %v497
    %v533 = vmul.f32 %v532, %v531
    %v534 = vmul.f32 0.5, %v533
    %v535 = vsub.f32 1.5, %v534
    %v536 = vmul.f32 %v531, %v535
    %v537 = vmul.f32 %v497, %v536
    %vm538 = vcmp.eq.f32.partialorder %v497, inf
    %v539 = vsel %vm538, %v497, %v537
    %vm540 = vcmp.eq.f32.partialorder %v497, 0.0
    %v541 = vand.u32 %v497, 2147483648
    %v542 = vsel %vm540, %v541, %v539
    %v543 = vrsqrt.pop %v501
    %v544 = vmul.f32 %v543, %v501
    %v545 = vmul.f32 %v544, %v543
    %v546 = vmul.f32 0.5, %v545
    %v547 = vsub.f32 1.5, %v546
    %v548 = vmul.f32 %v543, %v547
    %v549 = vmul.f32 %v501, %v548
    %vm550 = vcmp.eq.f32.partialorder %v501, inf
    %v551 = vsel %vm550, %v501, %v549
    %vm552 = vcmp.eq.f32.partialorder %v501, 0.0
    %v553 = vand.u32 %v501, 2147483648
    %v554 = vsel %vm552, %v553, %v551
    %v555 = vrsqrt.pop %v505
    %v556 = vmul.f32 %v555, %v505
    %v557 = vmul.f32 %v556, %v555
    %v558 = vmul.f32 0.5, %v557
    %v559 = vsub.f32 1.5, %v558
    %v560 = vmul.f32 %v555, %v559
    %v561 = vmul.f32 %v505, %v560
    %vm562 = vcmp.eq.f32.partialorder %v505, inf
    %v563 = vsel %vm562, %v505, %v561
    %vm564 = vcmp.eq.f32.partialorder %v505, 0.0
    %v565 = vand.u32 %v505, 2147483648
    %v566 = vsel %vm564, %v565, %v563
    %v567 = vrsqrt.pop %v509
    %v568 = vmul.f32 %v567, %v509
    %v569 = vmul.f32 %v568, %v567
    %v570 = vmul.f32 0.5, %v569
    %v571 = vsub.f32 1.5, %v570
    %v572 = vmul.f32 %v567, %v571
    %v573 = vmul.f32 %v509, %v572
    %vm574 = vcmp.eq.f32.partialorder %v509, inf
    %v575 = vsel %vm574, %v509, %v573
    %vm576 = vcmp.eq.f32.partialorder %v509, 0.0
    %v577 = vand.u32 %v509, 2147483648
    %v578 = vsel %vm576, %v577, %v575
    %v579 = vrsqrt.pop %v513
    %v580 = vmul.f32 %v579, %v513
    %v581 = vmul.f32 %v580, %v579
    %v582 = vmul.f32 0.5, %v581
    %v583 = vsub.f32 1.5, %v582
    %v584 = vmul.f32 %v579, %v583
    %v585 = vmul.f32 %v513, %v584
    %vm586 = vcmp.eq.f32.partialorder %v513, inf
    %v587 = vsel %vm586, %v513, %v585
    %vm588 = vcmp.eq.f32.partialorder %v513, 0.0
    %v589 = vand.u32 %v513, 2147483648
    %v590 = vsel %vm588, %v589, %v587
    %v591 = vrsqrt.pop %v517
    %v592 = vmul.f32 %v591, %v517
    %v593 = vmul.f32 %v592, %v591
    %v594 = vmul.f32 0.5, %v593
    %v595 = vsub.f32 1.5, %v594
    %v596 = vmul.f32 %v591, %v595
    %v597 = vmul.f32 %v517, %v596
    %vm598 = vcmp.eq.f32.partialorder %v517, inf
    %v599 = vsel %vm598, %v517, %v597
    %vm600 = vcmp.eq.f32.partialorder %v517, 0.0
    %v601 = vand.u32 %v517, 2147483648
    %v602 = vsel %vm600, %v601, %v599
    %v604 = vperm.slane %v50, 0
    %v606 = vsub.f32 %v530, %v604
    %v607 = vsub.f32 %v542, %v604
    %v608 = vsub.f32 %v554, %v604
    %v609 = vsub.f32 %v566, %v604
    %v610 = vsub.f32 %v578, %v604
    %v611 = vsub.f32 %v590, %v604
    %v612 = vsub.f32 %v602, %v604
    %v614 = vperm.slane %v51, 0
    %v616 = vmul.f32 %v614, %v606
    %v617 = vmul.f32 %v614, %v607
    %v618 = vmul.f32 %v614, %v608
    %v619 = vmul.f32 %v614, %v609
    %v620 = vmul.f32 %v614, %v610
    %v621 = vmul.f32 %v614, %v611
    %v622 = vmul.f32 %v614, %v612
    %v623 = vmul.f32 %v616, %v606
    %v624 = vmul.f32 %v617, %v607
    %v625 = vmul.f32 %v618, %v608
    %v626 = vmul.f32 %v619, %v609
    %v627 = vmul.f32 %v620, %v610
    %v628 = vmul.f32 %v621, %v611
    %v629 = vmul.f32 %v622, %v612
    %v630 = vmul.f32 %v623, 1.442695
    %v631 = vpow.pop %v630
    %v632 = vmul.f32 %v624, 1.442695
    %v633 = vpow.pop %v632
    %v634 = vmul.f32 %v625, 1.442695
    %v635 = vpow.pop %v634
    %v636 = vmul.f32 %v626, 1.442695
    %v637 = vpow.pop %v636
    %v638 = vmul.f32 %v627, 1.442695
    %v639 = vpow.pop %v638
    %v640 = vmul.f32 %v628, 1.442695
    %v641 = vpow.pop %v640
    %v642 = vmul.f32 %v629, 1.442695
    %v643 = vpow.pop %v642
    %644 = vst [vmem:[#allocation7] sm:$0xff] %v631
    %645 = vst [vmem:[#allocation7 + $0x8] sm:$0xff] %v633
    %646 = vst [vmem:[#allocation7 + $0x10] sm:$0xff] %v635
    %647 = vst [vmem:[#allocation7 + $0x18] sm:$0xff] %v637
    %648 = vst [vmem:[#allocation7 + $0x20] sm:$0xff] %v639
    %649 = vst [vmem:[#allocation7 + $0x28] sm:$0xff] %v641
    %650 = vst [vmem:[#allocation7 + $0x30] sm:$0xff] %v643
    // Predicated region
    $region26: #{tpu_custom_call.1} parent=1 // pred_check
      _
    $region27: #{tpu_custom_call.1} parent=1 // pred_check_branch
      %652 = sbr.rel (0) target = $region29
    $region28: #{tpu_custom_call.1} parent=1 // pred_region
      %654 = vsyncadd [#allocation4], 0
      %s655 = sshll.u32 [#allocation7], 4
      %s656 = int_to_ptr.vmem [resolvable:$true] %s655
      %s657 = sshll.u32 %s4, 4
      %s658 = int_to_ptr.hbm [resolvable:$true] %s657
      %663 = dma.vmem_to_hbm [thread:$0]  %s656, 896, %s658, [#allocation4], 128, 128, 8
    $region29: #{tpu_custom_call.1} parent=1 // pred_fallthru
      _
    // Predicated region
    $region30: #{tpu_custom_call.1} parent=1 // pred_check
      _
    $region31: #{tpu_custom_call.1} parent=1 // pred_check_branch
      %665 = sbr.rel (0) target = $region33
    $region32: #{tpu_custom_call.1} parent=1 // pred_region
      %667 = dma.done [#allocation4], 896
    $region33: #{tpu_custom_call.1} parent=1 // pred_fallthru
      _
    %668 = vsyncpa [#allocation3], 1
    %669 = vsyncpa [#allocation6], 1
    %670 = vsyncpa [#allocation4], 1

</llo_original>
